<compile_context>
chip_gen: v6e
topology: v6e:2x2x1
jax: 0.10.0
libtpu: 0.0.40
codegen_flags: <defaults>
</compile_context>

<pallas_src>
import functools

import jax
import jax.numpy as jnp
from jax.experimental import pallas as pl
from jax.experimental.pallas import tpu as pltpu


def _round_up(x: int, m: int) -> int:
    return ((x + m - 1) // m) * m


# --------------------------------------------------------------------------
# Kernels
# --------------------------------------------------------------------------
def _vit_head_fused_kernel(x_ref, wr_ref, br_ref, wd_ref, bd_ref, o_ref):
    """Fully fused head (resident classifier weight).  Grid: (B tiles,).

    x_ref : [tb, H]   bf16 CLS-token activations for this B tile
    wr_ref: [H, R]    bf16 representation weight, [in, out]  (resident)
    br_ref: [1, R]    f32  representation bias                (resident)
    wd_ref: [R, Cp]   bf16 classifier weight, [in, out]       (resident)
    bd_ref: [1, Cp]   f32  classifier bias                    (resident)
    o_ref : [tb, Cp]  f32  logits tile
    """
    h = jnp.dot(x_ref[...], wr_ref[...], preferred_element_type=jnp.float32)
    h = (h + br_ref[...]).astype(jnp.bfloat16)       # bf16 MXU operand for stage 2
    o_ref[...] = (jnp.dot(h, wd_ref[...], preferred_element_type=jnp.float32)
                  + bd_ref[...]).astype(o_ref.dtype)


def _vit_repr_kernel(x_ref, wr_ref, br_ref, h_ref):
    """Representation projection for the whole batch.  Grid: (B tiles,).

    h_ref is bf16: the result is only ever a matmul operand downstream.
    """
    h = jnp.dot(x_ref[...], wr_ref[...], preferred_element_type=jnp.float32)
    h_ref[...] = (h + br_ref[...]).astype(h_ref.dtype)


def _vit_classifier_kernel(h_ref, wd_ref, bd_ref, o_ref):
    """Classifier-only kernel.  Grid: (C tiles OUTER, B tiles INNER).

    With C on the outer axis the wd tile index is constant across the inner
    B sweep, so the classifier weight streams through HBM exactly once per
    batch (not once per B tile).  No carried state -> both axes "parallel".
    """
    o_ref[...] = (jnp.dot(h_ref[...], wd_ref[...], preferred_element_type=jnp.float32)
                  + bd_ref[...]).astype(o_ref.dtype)


# --------------------------------------------------------------------------
# One-time parameter prep (parameter-load time, NOT per call)
# --------------------------------------------------------------------------
def prepare_vit_head_params(w_repr, b_repr, w_dense, b_dense, *, lane_tile=128):
    """Transpose [out,in]->[in,out], cast weights bf16, pad C to lane multiple."""
    R, H = w_repr.shape
    C, R2 = w_dense.shape
    assert R2 == R, (R2, R)
    c_pad = _round_up(C, lane_tile)

    wr_t = jnp.asarray(w_repr, jnp.float32).T.astype(jnp.bfloat16)     # [H, R]
    br = jnp.asarray(b_repr, jnp.float32).reshape(1, R)                 # [1, R]

    wd_t = jnp.asarray(w_dense, jnp.float32).T.astype(jnp.bfloat16)     # [R, C]
    wd_t = jnp.pad(wd_t, ((0, 0), (0, c_pad - C)))                      # [R, Cp]
    bd = jnp.asarray(b_dense, jnp.float32).reshape(1, C)
    bd = jnp.pad(bd, ((0, 0), (0, c_pad - C)))                          # [1, Cp]

    return wr_t, br, wd_t, bd, C


# --------------------------------------------------------------------------
# Wrapper
# --------------------------------------------------------------------------
# Resident-classifier budget (bf16 Wd bytes).  4 MiB keeps the fused path
# comfortably inside even v7x's 32 MiB default scoped VMEM with default
# double-buffering.  On v5e/v6e (128 MiB physical VMEM) this can be raised
# together with vmem_limit_bytes to keep e.g. a 21k-class weight resident.
_RESIDENT_WD_BUDGET_BYTES = 4 * 1024 * 1024


@functools.partial(jax.jit, static_argnames=("num_classes", "force_streaming"))
def vit_head(x, wr_t, br, wd_t, bd, *, num_classes, force_streaming=False):
    """x: [B, S, H]; prepared params from prepare_vit_head_params().

    Returns fp32 logits [B, num_classes].
    """
    B, S, H = x.shape
    H2, R = wr_t.shape
    assert H2 == H, (H2, H)
    R2, c_pad = wd_t.shape
    assert R2 == R, (R2, R)

    # CLS token only, cast to bf16 once in the wrapper:
    # the kernels never see the full [B, S, H] tensor and the x DMA is halved.
    x_cls = x[:, 0, :].astype(jnp.bfloat16)                  # [B, H] bf16

    # B tile: multiple of 8 sublanes, up to 256 rows (fills 2x256^2 MXU).
    tb = min(_round_up(B, 8), 256)
    b_pad = _round_up(B, tb)
    if b_pad != B:
        x_cls = jnp.pad(x_cls, ((0, b_pad - B), (0, 0)))
    nb = b_pad // tb

    wd_bytes = R * c_pad * 2  # bf16
    use_fused = (not force_streaming) and (wd_bytes <= _RESIDENT_WD_BUDGET_BYTES)

    if use_fused:
        # ---- Path A: resident classifier weight, single fused kernel -------
        out_padded = pl.pallas_call(
            _vit_head_fused_kernel,
            out_shape=jax.ShapeDtypeStruct((b_pad, c_pad), jnp.float32),
            grid_spec=pltpu.PrefetchScalarGridSpec(
                num_scalar_prefetch=0,
                grid=(nb,),
                in_specs=[
                    pl.BlockSpec((tb, H), lambda i: (i, 0)),     # CLS rows
                    pl.BlockSpec((H, R), lambda i: (0, 0)),      # repr weight (resident)
                    pl.BlockSpec((1, R), lambda i: (0, 0)),      # repr bias
                    pl.BlockSpec((R, c_pad), lambda i: (0, 0)),  # classifier weight (resident)
                    pl.BlockSpec((1, c_pad), lambda i: (0, 0)),  # classifier bias
                ],
                out_specs=pl.BlockSpec((tb, c_pad), lambda i: (i, 0)),
            ),
            compiler_params=pltpu.CompilerParams(
                dimension_semantics=("parallel",),   # independent B tiles
            ),
        )(x_cls, wr_t, br, wd_t, bd)
        return out_padded[:B, :num_classes]

    # ---- Path B: huge class count -> stream the classifier weight once -----
    # (1) representation projection for the whole batch, output kept in bf16.
    h = pl.pallas_call(
        _vit_repr_kernel,
        out_shape=jax.ShapeDtypeStruct((b_pad, R), jnp.bfloat16),
        grid_spec=pltpu.PrefetchScalarGridSpec(
            num_scalar_prefetch=0,
            grid=(nb,),
            in_specs=[
                pl.BlockSpec((tb, H), lambda i: (i, 0)),
                pl.BlockSpec((H, R), lambda i: (0, 0)),
                pl.BlockSpec((1, R), lambda i: (0, 0)),
            ],
            out_specs=pl.BlockSpec((tb, R), lambda i: (i, 0)),
        ),
        compiler_params=pltpu.CompilerParams(
            dimension_semantics=("parallel",),
        ),
    )(x_cls, wr_t, br)

    # (2) classifier sweep.  tn: biggest 128-multiple <= 512 dividing c_pad
    #     (4x fewer grid steps / larger DMAs vs tn=128).
    tn = 128
    for cand in (512, 256):
        if c_pad % cand == 0:
            tn = cand
            break
    nc = c_pad // tn

    out_padded = pl.pallas_call(
        _vit_classifier_kernel,
        out_shape=jax.ShapeDtypeStruct((b_pad, c_pad), jnp.float32),
        grid_spec=pltpu.PrefetchScalarGridSpec(
            num_scalar_prefetch=0,
            # C OUTER, B INNER: wd block index constant across the inner B
            # sweep -> the dominant weight stream goes through HBM only once.
            grid=(nc, nb),
            in_specs=[
                pl.BlockSpec((tb, R), lambda c, b: (b, 0)),   # bf16 h tile (tiny)
                pl.BlockSpec((R, tn), lambda c, b: (0, c)),   # classifier weight tile
                pl.BlockSpec((1, tn), lambda c, b: (0, c)),   # classifier bias tile
            ],
            out_specs=pl.BlockSpec((tb, tn), lambda c, b: (b, c)),
        ),
        compiler_params=pltpu.CompilerParams(
            # No carried state -> both axes independent; v7x 2-TC megacore
            # splits the classifier sweep even for a single B tile.
            dimension_semantics=("parallel", "parallel"),
        ),
    )(h, wd_t, bd)
    return out_padded[:B, :num_classes]


# --------------------------------------------------------------------------
# References
# --------------------------------------------------------------------------
def vit_head_ref_f32(x, w_repr, b_repr, w_dense, b_dense):
    """Pure fp32 JAX reference (mirrors the PyTorch forward)."""
    cls = x[:, 0]
    h = cls @ w_repr.T + b_repr
    return h @ w_dense.T + b_dense


def vit_head_ref_bf16(x, w_repr, b_repr, w_dense, b_dense):
    """Reference with the same bf16-operand / fp32-accumulate numerics."""
    cls = x[:, 0].astype(jnp.bfloat16)
    wr = w_repr.T.astype(jnp.bfloat16)
    h = jnp.dot(cls, wr, preferred_element_type=jnp.float32) + b_repr
    wd = w_dense.T.astype(jnp.bfloat16)
    return jnp.dot(h.astype(jnp.bfloat16), wd,
                   preferred_element_type=jnp.float32) + b_dense


if __name__ == "__main__":
    # Small shapes consistent with the module's forward:
    B, S, H = 8, 8, 32           # batch, seq (CLS at position 0), hidden_size
    R, C = 32, 16                # representation_size, num_classes

    key = jax.random.PRNGKey(0)
    kx, k1, k2, k3, k4 = jax.random.split(key, 5)

    x = jax.random.normal(kx, (B, S, H), dtype=jnp.float32)
    w_repr = jax.random.normal(k1, (R, H), dtype=jnp.float32) * 0.02
    b_repr = jax.random.normal(k2, (R,), dtype=jnp.float32) * 0.02
    w_dense = jax.random.normal(k3, (C, R), dtype=jnp.float32) * 0.02
    b_dense = jax.random.normal(k4, (C,), dtype=jnp.float32) * 0.02

    # One-time parameter prep (transpose / bf16 / lane padding).
    wr_t, br, wd_t, bd, num_classes = prepare_vit_head_params(
        w_repr, b_repr, w_dense, b_dense)

    ref_bf16 = vit_head_ref_bf16(x, w_repr, b_repr, w_dense, b_dense)
    ref_f32 = vit_head_ref_f32(x, w_repr, b_repr, w_dense, b_dense)

    # Path A: fused, resident classifier weight (the common ViT-head case).
    out = vit_head(x, wr_t, br, wd_t, bd, num_classes=num_classes)
    out = jax.block_until_ready(out)
    assert out.shape == (B, C), out.shape
    assert out.dtype == jnp.float32, out.dtype
    assert jnp.allclose(out, ref_bf16, atol=1e-4, rtol=1e-4), "fused: mismatch vs bf16 ref"
    assert jnp.allclose(out, ref_f32, atol=5e-2, rtol=5e-2), "fused: mismatch vs fp32 ref"

    # Path B: streamed classifier weight (exercised here with force_streaming
    # to verify the large-num_classes code path on small shapes).
    out_s = vit_head(x, wr_t, br, wd_t, bd, num_classes=num_classes,
                     force_streaming=True)
    out_s = jax.block_until_ready(out_s)
    assert out_s.shape == (B, C), out_s.shape
    assert jnp.allclose(out_s, ref_bf16, atol=1e-4, rtol=1e-4), "streamed: mismatch vs bf16 ref"
    assert jnp.allclose(out_s, ref_f32, atol=5e-2, rtol=5e-2), "streamed: mismatch vs fp32 ref"

    print("KERNEL_OK")
</pallas_src>

<mosaic_0001>
module attributes {stable_mosaic.version = 11 : i64} {
  func.func @_vit_head_fused_kernel(%arg0: i32, %arg1: memref<8x32xbf16, #tpu.memory_space<vmem>>, %arg2: memref<32x32xbf16, #tpu.memory_space<vmem>>, %arg3: memref<1x32xf32, #tpu.memory_space<vmem>>, %arg4: memref<32x128xbf16, #tpu.memory_space<vmem>>, %arg5: memref<1x128xf32, #tpu.memory_space<vmem>>, %arg6: memref<8x128xf32, #tpu.memory_space<vmem>>) attributes {dimension_semantics = [#tpu.dimension_semantics<parallel>], iteration_bounds = array<i64: 1>, scalar_prefetch = 0 : i64, scratch_operands = 0 : i64, tpu.core_type = #tpu.core_type<tc>, window_params = [{transform_indices = @transform_0, window_bounds = array<i64: 8, 32>}, {pipeline_mode = #tpu.pipeline_mode<synchronous>, transform_indices = @transform_1, window_bounds = array<i64: 32, 32>}, {pipeline_mode = #tpu.pipeline_mode<synchronous>, transform_indices = @transform_2, window_bounds = array<i64: 1, 32>}, {pipeline_mode = #tpu.pipeline_mode<synchronous>, transform_indices = @transform_3, window_bounds = array<i64: 32, 128>}, {pipeline_mode = #tpu.pipeline_mode<synchronous>, transform_indices = @transform_4, window_bounds = array<i64: 1, 128>}, {transform_indices = @transform_5, window_bounds = array<i64: 8, 128>}]} {
    %c0 = arith.constant 0 : index
    %c0_0 = arith.constant 0 : index
    %0 = vector.load %arg1[%c0, %c0_0] : memref<8x32xbf16, #tpu.memory_space<vmem>>, vector<8x32xbf16>
    %c0_1 = arith.constant 0 : index
    %c0_2 = arith.constant 0 : index
    %1 = vector.load %arg2[%c0_1, %c0_2] : memref<32x32xbf16, #tpu.memory_space<vmem>>, vector<32x32xbf16>
    %cst = arith.constant dense<0.000000e+00> : vector<8x32xf32>
    %2 = tpu.matmul %0, %1, %cst {dimension_numbers = #tpu.dot_dimension_numbers<[1], [0], [0], [1], [0, 0, 1, 1], [], []>} : vector<8x32xbf16>, vector<32x32xbf16>, vector<8x32xf32> -> vector<8x32xf32>
    %c0_3 = arith.constant 0 : index
    %c0_4 = arith.constant 0 : index
    %3 = vector.load %arg3[%c0_3, %c0_4] : memref<1x32xf32, #tpu.memory_space<vmem>>, vector<1x32xf32>
    %4 = vector.broadcast %3 : vector<1x32xf32> to vector<8x32xf32>
    %5 = arith.addf %2, %4 : vector<8x32xf32>
    %6 = arith.truncf %5 : vector<8x32xf32> to vector<8x32xbf16>
    %c0_5 = arith.constant 0 : index
    %c0_6 = arith.constant 0 : index
    %7 = vector.load %arg4[%c0_5, %c0_6] : memref<32x128xbf16, #tpu.memory_space<vmem>>, vector<32x128xbf16>
    %cst_7 = arith.constant dense<0.000000e+00> : vector<8x128xf32>
    %8 = tpu.matmul %6, %7, %cst_7 {dimension_numbers = #tpu.dot_dimension_numbers<[1], [0], [0], [1], [0, 0, 1, 1], [], []>} : vector<8x32xbf16>, vector<32x128xbf16>, vector<8x128xf32> -> vector<8x128xf32>
    %c0_8 = arith.constant 0 : index
    %c0_9 = arith.constant 0 : index
    %9 = vector.load %arg5[%c0_8, %c0_9] : memref<1x128xf32, #tpu.memory_space<vmem>>, vector<1x128xf32>
    %10 = vector.broadcast %9 : vector<1x128xf32> to vector<8x128xf32>
    %11 = arith.addf %8, %10 : vector<8x128xf32>
    %c0_10 = arith.constant 0 : index
    %c0_11 = arith.constant 0 : index
    %12 = vector.load %arg6[%c0_10, %c0_11] : memref<8x128xf32, #tpu.memory_space<vmem>>, vector<8x128xf32>
    tpu.vector_store %arg6[%c0_10, %c0_11], %11 {strides = array<i32>} : memref<8x128xf32, #tpu.memory_space<vmem>>, vector<8x128xf32>,
    return
  }
  func.func @transform_0(%arg0: i32) -> (i32, i32) {
    %c0_i32 = arith.constant 0 : i32
    %c0_i32_0 = arith.constant 0 : i32
    return %arg0, %c0_i32 : i32, i32
  }
  func.func @transform_1(%arg0: i32) -> (i32, i32) {
    %c0_i32 = arith.constant 0 : i32
    %c0_i32_0 = arith.constant 0 : i32
    %c0_i32_1 = arith.constant 0 : i32
    return %c0_i32, %c0_i32_0 : i32, i32
  }
  func.func @transform_2(%arg0: i32) -> (i32, i32) {
    %c0_i32 = arith.constant 0 : i32
    %c0_i32_0 = arith.constant 0 : i32
    %c0_i32_1 = arith.constant 0 : i32
    return %c0_i32, %c0_i32_0 : i32, i32
  }
  func.func @transform_3(%arg0: i32) -> (i32, i32) {
    %c0_i32 = arith.constant 0 : i32
    %c0_i32_0 = arith.constant 0 : i32
    %c0_i32_1 = arith.constant 0 : i32
    return %c0_i32, %c0_i32_0 : i32, i32
  }
  func.func @transform_4(%arg0: i32) -> (i32, i32) {
    %c0_i32 = arith.constant 0 : i32
    %c0_i32_0 = arith.constant 0 : i32
    %c0_i32_1 = arith.constant 0 : i32
    return %c0_i32, %c0_i32_0 : i32, i32
  }
  func.func @transform_5(%arg0: i32) -> (i32, i32) {
    %c0_i32 = arith.constant 0 : i32
    %c0_i32_0 = arith.constant 0 : i32
    return %arg0, %c0_i32 : i32, i32
  }
}

</mosaic_0001>

<llo_original>
// kernel: vit_head.1
$region0: #{vit_head.1}
  #allocation0 [shape = 'u32[]', space=smem, size = 0x4, offset = 0x4, fixed_abs, tag = 'smem constant byte address 0x4 - core index']
  #allocation1 [shape = 'u32[144,128]{1,0:T(1,128)}', space=vmem, size = 0x12000, scoped, tag = 'internal scratch']
  %s0 = inlined_call_operand.vmem [shape: bf16[8,32], index: 0, kind: input, shape index: {}]
  %s1 = inlined_call_operand.vmem [shape: bf16[32,32], index: 1, kind: input, shape index: {}]
  %s2 = inlined_call_operand.vmem [shape: f32[1,32], index: 2, kind: input, shape index: {}]
  %s3 = inlined_call_operand.vmem [shape: bf16[32,128], index: 3, kind: input, shape index: {}]
  %s4 = inlined_call_operand.vmem [shape: f32[1,128], index: 4, kind: input, shape index: {}]
  %s5 = inlined_call_operand.hbm [shape: f32[8,128], index: 5, kind: output, shape index: {}]
  %s6 = sld [smem:[#allocation0]]
  $region30: #{vit_head.1} parent=0
    _
  %s8 = ssub.s32 1, %s6
  %s9 = scalar_select 0, %s8, %s6
  $region1: #{vit_head.1} parent=0
    #allocation2 [shape = 'u8[4096]{0}', space=vmem, size = 0x1000, scoped, tag = 'output window, operand 0, single buffered']
    #allocation3 [shape = 's32[1]{0}', space=sflag, size = 0x4, scoped, tag = 'scoped memory for vit_head.1']
    %10 = vsyncpa [#allocation3], 0
    // Predicated region
    $region2: #{vit_head.1} parent=1 // pred_check
      _
    $region3: #{vit_head.1} parent=1 // pred_check_branch
      %12 = sbr.rel (0) target = $region5
    $region4: #{vit_head.1} parent=1 // pred_region
      _
    $region5: #{vit_head.1} parent=1 // pred_fallthru
      _
    // Predicated region
    $region6: #{vit_head.1} parent=1 // pred_check
      _
    $region7: #{vit_head.1} parent=1 // pred_check_branch
      %14 = sbr.rel (0) target = $region9
    $region8: #{vit_head.1} parent=1 // pred_region
      _
    $region9: #{vit_head.1} parent=1 // pred_fallthru
      _
    // Predicated region
    $region10: #{vit_head.1} parent=1 // pred_check
      _
    $region11: #{vit_head.1} parent=1 // pred_check_branch
      %16 = sbr.rel (0) target = $region13
    $region12: #{vit_head.1} parent=1 // pred_region
      _
    $region13: #{vit_head.1} parent=1 // pred_fallthru
      _
    // Predicated region
    $region14: #{vit_head.1} parent=1 // pred_check
      _
    $region15: #{vit_head.1} parent=1 // pred_check_branch
      %18 = sbr.rel (0) target = $region17
    $region16: #{vit_head.1} parent=1 // pred_region
      _
    $region17: #{vit_head.1} parent=1 // pred_fallthru
      _
    // Predicated region
    $region18: #{vit_head.1} parent=1 // pred_check
      _
    $region19: #{vit_head.1} parent=1 // pred_check_branch
      %20 = sbr.rel (0) target = $region21
    $region20: #{vit_head.1} parent=1 // pred_region
      _
    $region21: #{vit_head.1} parent=1 // pred_fallthru
      _
    %v22 = vld [vmem:[%s0] sm:$0xf]
    %v23 = vld [vmem:[%s1] sm:$0xf]
    %v24 = vld [vmem:[%s1 + $0x4] sm:$0xf]
    %v25 = vld [vmem:[%s1 + $0x8] sm:$0xf]
    %v26 = vld [vmem:[%s1 + $0xc] sm:$0xf]
    %v27 = vld [vmem:[%s2] sm:$0x1]
    %v29 = vlaneseq
    %v30 = vshrl.u32 %v29, 7
    %v31 = vsub.s32 0, %v30
    %v32 = vrot.slane %v27, %v31
    %v38 = vunpack.c.l.b16 %v23
    %v39 = vunpack.c.l.b16 %v24
    %v40 = vunpack.c.l.b16 %v25
    %v41 = vunpack.c.l.b16 %v26
    %v42 = vpack.c.b16 %v39, %v38
    %v43 = vpack.c.b16 %v41, %v40
    %vm46 = vcmask 261120
    %v48 = vsel %vm46, %v22, 0
    %50 = vmatprep.subr.bf16.mxu0 0
    %51 = vmatpush1.bf16.msra.mxu0 0
    %52 = vmatprep.subr.bf16.mxu0 0
    %53 = vmatpush1.bf16.msra.mxu0 0
    %54 = vmatprep.subr.bf16.mxu0 0
    %55 = vmatpush1.bf16.msra.mxu0 0
    %56 = vmatprep.subr.bf16.mxu0 0
    %57 = vmatpush1.bf16.msra.mxu0 0
    %58 = vmatprep.subr.bf16.mxu0 0
    %59 = vmatpush1.bf16.msra.mxu0 0
    %60 = vmatprep.subr.bf16.mxu0 0
    %61 = vmatpush1.bf16.msra.mxu0 0
    %62 = vmatprep.subr.bf16.mxu0 0
    %63 = vmatpush1.bf16.msra.mxu0 %v43
    %64 = vmatprep.subr.bf16.mxu0 0
    %65 = vmatpush1.bf16.msra.mxu0 %v42
    %66 = vmatprep.subr.bf16.mxu0 0
    %67 = vmatpush2.bf16.msra.mxu0 0
    %68 = vmatprep.subr.bf16.mxu0 0
    %69 = vmatpush2.bf16.msra.mxu0 0
    %70 = vmatprep.subr.bf16.mxu0 0
    %71 = vmatpush2.bf16.msra.mxu0 0
    %72 = vmatprep.subr.bf16.mxu0 0
    %73 = vmatpush2.bf16.msra.mxu0 0
    %74 = vmatprep.subr.bf16.mxu0 0
    %75 = vmatpush2.bf16.msra.mxu0 0
    %76 = vmatprep.subr.bf16.mxu0 0
    %77 = vmatpush2.bf16.msra.mxu0 0
    %78 = vmatprep.subr.bf16.mxu0 0
    %79 = vmatpush2.bf16.msra.mxu0 0
    %80 = vmatprep.subr.bf16.mxu0 0
    %81 = vmatpush2.bf16.msra.mxu0 0
    %82 = vmatprep.mubr.bf16.mxu0 0
    %83 = vmatmul.mubr.bf16.gmra.mxu0 %v48
    %v84 = vpop.f32.mrf.mxu0
    %v85 = vadd.f32 %v32, %v84
    %v86 = vpop.f32.mrf.mxu0
    %v87 = vpop.f32.mrf.mxu0
    %v88 = vpop.f32.mrf.mxu0
    %89 = vdwg.mxu0
    %v90 = vpack.c.bf16 %v85, %v85
    %v91 = vld [vmem:[%s3] sm:$0xf]
    %v92 = vld [vmem:[%s3 + $0x4] sm:$0xf]
    %v93 = vld [vmem:[%s3 + $0x8] sm:$0xf]
    %v94 = vld [vmem:[%s3 + $0xc] sm:$0xf]
    %v95 = vld [vmem:[%s4] sm:$0x1]
    %v97 = vlaneseq
    %v98 = vshrl.u32 %v97, 7
    %v99 = vsub.s32 0, %v98
    %v100 = vrot.slane %v95, %v99
    %v106 = vunpack.c.l.b16 %v91
    %v107 = vunpack.c.l.b16 %v92
    %v108 = vunpack.c.l.b16 %v93
    %v109 = vunpack.c.l.b16 %v94
    %v110 = vpack.c.b16 %v107, %v106
    %v111 = vpack.c.b16 %v109, %v108
    %v115 = vsel %vm46, %v90, 0
    %117 = vmatprep.subr.bf16.mxu0 0
    %118 = vmatpush1.bf16.msra.mxu0 0
    %119 = vmatprep.subr.bf16.mxu0 0
    %120 = vmatpush1.bf16.msra.mxu0 0
    %121 = vmatprep.subr.bf16.mxu0 0
    %122 = vmatpush1.bf16.msra.mxu0 0
    %123 = vmatprep.subr.bf16.mxu0 0
    %124 = vmatpush1.bf16.msra.mxu0 0
    %125 = vmatprep.subr.bf16.mxu0 0
    %126 = vmatpush1.bf16.msra.mxu0 0
    %127 = vmatprep.subr.bf16.mxu0 0
    %128 = vmatpush1.bf16.msra.mxu0 0
    %129 = vmatprep.subr.bf16.mxu0 0
    %130 = vmatpush1.bf16.msra.mxu0 %v111
    %131 = vmatprep.subr.bf16.mxu0 0
    %132 = vmatpush1.bf16.msra.mxu0 %v110
    %133 = vmatprep.subr.bf16.mxu0 0
    %134 = vmatpush2.bf16.msra.mxu0 0
    %135 = vmatprep.subr.bf16.mxu0 0
    %136 = vmatpush2.bf16.msra.mxu0 0
    %137 = vmatprep.subr.bf16.mxu0 0
    %138 = vmatpush2.bf16.msra.mxu0 0
    %139 = vmatprep.subr.bf16.mxu0 0
    %140 = vmatpush2.bf16.msra.mxu0 0
    %141 = vmatprep.subr.bf16.mxu0 0
    %142 = vmatpush2.bf16.msra.mxu0 0
    %143 = vmatprep.subr.bf16.mxu0 0
    %144 = vmatpush2.bf16.msra.mxu0 0
    %145 = vmatprep.subr.bf16.mxu0 0
    %146 = vmatpush2.bf16.msra.mxu0 0
    %147 = vmatprep.subr.bf16.mxu0 0
    %148 = vmatpush2.bf16.msra.mxu0 0
    %149 = vmatprep.mubr.bf16.mxu0 0
    %150 = vmatmul.mubr.bf16.gmra.mxu0 %v115
    %v151 = vpop.f32.mrf.mxu0
    %v152 = vadd.f32 %v100, %v151
    %v153 = vpop.f32.mrf.mxu0
    %v154 = vpop.f32.mrf.mxu0
    %v155 = vpop.f32.mrf.mxu0
    %156 = vdwg.mxu0
    %157 = vst [vmem:[#allocation2] sm:$0xff] %v152
    // Predicated region
    $region22: #{vit_head.1} parent=1 // pred_check
      _
    $region23: #{vit_head.1} parent=1 // pred_check_branch
      %159 = sbr.rel (0) target = $region25
    $region24: #{vit_head.1} parent=1 // pred_region
      %s161 = ssub.s32 128, 128
      %162 = vsyncadd [#allocation3], %s161
      %s164 = sshll.u32 [#allocation2], 4
      %s165 = int_to_ptr.vmem [resolvable:$true] %s164
      %167 = dma.vmem_to_hbm [thread:$0]  %s165, 128, %s5, [#allocation3]
    $region25: #{vit_head.1} parent=1 // pred_fallthru
      _
    // Predicated region
    $region26: #{vit_head.1} parent=1 // pred_check
      _
    $region27: #{vit_head.1} parent=1 // pred_check_branch
      %169 = sbr.rel (0) target = $region29
    $region28: #{vit_head.1} parent=1 // pred_region
      %170 = dma.done [#allocation3], 128
    $region29: #{vit_head.1} parent=1 // pred_fallthru
      _
    %171 = vsyncpa [#allocation3], 1

</llo_original>
